<compile_context>
chip_gen: v5e
topology: v5e:2x2
jax: 0.10.0
libtpu: 0.0.40
codegen_flags: <defaults>
</compile_context>

<pallas_src>
import math

import jax
import jax.numpy as jnp
from jax.experimental import pallas as pl
from jax.experimental.pallas import tpu as pltpu


def _round_up(x: int, m: int) -> int:
    return ((x + m - 1) // m) * m


def _rotary_outer_kernel(consts_ref, out_ref):
    """Write one lane-dense tile of freqs = outer(seq, inv_freq).

    consts_ref: (2, width) f32, VMEM-resident (constant block index, DMA'd once):
        row 0: A[c] = pos_per_row * inv_freq(c % half_dim)
        row 1: C[c] = (c // half_dim) * inv_freq(c % half_dim)
    out_ref:    (tile_rows, width) f32 tile, width a multiple of 128 lanes.

    Slab element [r, c] of grid step i equals
        ((i*tile_rows + r) * pos_per_row + c // half_dim) * inv_freq(c % half_dim)
      = (i*tile_rows + r) * A[c] + C[c]
    """
    i = pl.program_id(0)
    tile_rows, width = out_ref.shape

    a = consts_ref[0:1, :]  # (1, width)
    c = consts_ref[1:2, :]  # (1, width)

    # Per-grid-step offset folded into one tiny (1, width) row (cost ~width/128 vregs).
    base = (i * tile_rows).astype(jnp.float32)
    b_row = base * a + c

    # Hot path: iota + cast + mul + add per element; sublane-broadcast of a/b_row.
    row = jax.lax.broadcasted_iota(jnp.int32, (tile_rows, width), 0).astype(jnp.float32)
    out_ref[...] = row * a + b_row


def vision_rotary_embedding(seq_len: int, dim: int, theta: float = 10000.0):
    """JAX wrapper reproducing VisionRotaryEmbedding(dim, theta).forward(seq_len)."""
    half_dim = (dim + 1) // 2  # == len(arange(0, dim, 2))

    # Pack `pos_per_row` consecutive seq positions per slab row so the last dim
    # is a multiple of 128 lanes (lane-dense, unmasked stores).
    pos_per_row = 128 // math.gcd(half_dim, 128)
    width = pos_per_row * half_dim          # multiple of 128
    rows_total = pl.cdiv(seq_len, pos_per_row)
    row_bytes = width * 4

    # Tile choice: one full-array block for small outputs; otherwise ~4 MiB
    # blocks (8-sublane aligned) with >= 2 grid steps so v7x's 2nd TC has work.
    tile_budget = 4 * 1024 * 1024
    max_tile_rows = max(8, (tile_budget // row_bytes) // 8 * 8)
    if rows_total * row_bytes <= 2 * 1024 * 1024 and rows_total <= max_tile_rows:
        tile_rows = rows_total              # block == full array (always legal)
    else:
        tile_rows = min(max_tile_rows, _round_up(pl.cdiv(rows_total, 2), 8))
    grid = (pl.cdiv(rows_total, tile_rows),)

    # Grid-invariant per-lane constants (tiny; computed once in plain JAX).
    inv_freq = 1.0 / (
        theta ** (jnp.arange(0, dim, 2, dtype=jnp.float32) / jnp.float32(dim))
    )                                                   # (half_dim,)
    inv_row = jnp.tile(inv_freq, pos_per_row)           # (width,)
    col = (jnp.arange(width, dtype=jnp.int32) // half_dim).astype(jnp.float32)
    consts = jnp.stack(
        [jnp.float32(pos_per_row) * inv_row, col * inv_row]
    ).astype(jnp.float32)                               # (2, width)

    slab = pl.pallas_call(
        _rotary_outer_kernel,
        out_shape=jax.ShapeDtypeStruct((rows_total, width), jnp.float32),
        grid_spec=pltpu.PrefetchScalarGridSpec(
            num_scalar_prefetch=0,
            grid=grid,
            in_specs=[pl.BlockSpec((2, width), lambda i: (0, 0))],  # VMEM-resident
            out_specs=pl.BlockSpec((tile_rows, width), lambda i: (i, 0)),
        ),
        compiler_params=pltpu.CompilerParams(
            dimension_semantics=("parallel",),
        ),
    )(consts)

    # Row-major identical relayout back to (seq_len, half_dim); the slice only
    # exists when seq_len is not a multiple of pos_per_row.
    freqs = slab.reshape(rows_total * pos_per_row, half_dim)
    if rows_total * pos_per_row != seq_len:
        freqs = freqs[:seq_len]
    return freqs


def _reference(seq_len: int, dim: int, theta: float = 10000.0):
    inv_freq = 1.0 / (
        theta ** (jnp.arange(0, dim, 2, dtype=jnp.float32) / jnp.float32(dim))
    )
    seq = jnp.arange(seq_len, dtype=jnp.float32)
    return jnp.outer(seq, inv_freq)


def _check(seq_len, dim, theta=10000.0):
    out = vision_rotary_embedding(seq_len, dim, theta)
    jax.block_until_ready(out)
    ref = _reference(seq_len, dim, theta)
    half_dim = (dim + 1) // 2
    assert out.shape == (seq_len, half_dim), (out.shape, (seq_len, half_dim))
    assert out.dtype == jnp.float32
    assert jnp.allclose(out, ref, rtol=1e-5, atol=1e-6), float(
        jnp.max(jnp.abs(out - ref))
    )
    return out


if __name__ == "__main__":
    # Deterministic inputs: the module's forward only depends on (seq_len, dim,
    # theta) aranges; PRNG key unused but constructed for convention.
    key = jax.random.PRNGKey(0)
    del key

    # Small shape consistent with the module: head dim 32 -> inv_freq (16,),
    # sequence length 8 -> output (8, 16).
    _check(seq_len=8, dim=32, theta=10000.0)

    # Extra coverage: ragged tail (seq_len % pos_per_row != 0).
    _check(seq_len=300, dim=40, theta=10000.0)

    # Extra coverage: multi-step grid with ragged last block.
    _check(seq_len=32776, dim=32, theta=10000.0)

    print("KERNEL_OK")
</pallas_src>

<mosaic_0001>
module attributes {stable_mosaic.version = 11 : i64} {
  func.func @_rotary_outer_kernel(%arg0: i32, %arg1: memref<2x128xf32, #tpu.memory_space<vmem>>, %arg2: memref<1x128xf32, #tpu.memory_space<vmem>>) attributes {dimension_semantics = [#tpu.dimension_semantics<parallel>], iteration_bounds = array<i64: 1>, scalar_prefetch = 0 : i64, scratch_operands = 0 : i64, tpu.core_type = #tpu.core_type<tc>, window_params = [{pipeline_mode = #tpu.pipeline_mode<synchronous>, transform_indices = @transform_0, window_bounds = array<i64: 2, 128>}, {transform_indices = @transform_1, window_bounds = array<i64: 1, 128>}]} {
    %c0 = arith.constant 0 : index
    %c0_0 = arith.constant 0 : index
    %0 = vector.load %arg1[%c0, %c0_0] : memref<2x128xf32, #tpu.memory_space<vmem>>, vector<1x128xf32>
    %c1 = arith.constant 1 : index
    %c0_1 = arith.constant 0 : index
    %1 = vector.load %arg1[%c1, %c0_1] : memref<2x128xf32, #tpu.memory_space<vmem>>, vector<1x128xf32>
    %c1_i32 = arith.constant 1 : i32
    %2 = arith.muli %arg0, %c1_i32 : i32
    %3 = arith.sitofp %2 : i32 to f32
    %4 = vector.broadcast %3 : f32 to vector<1x128xf32>
    %5 = arith.mulf %4, %0 : vector<1x128xf32>
    %6 = arith.addf %5, %1 : vector<1x128xf32>
    %7 = tpu.iota {dimensions = array<i32: 0>} : vector<1x128xi32>
    %8 = arith.sitofp %7 : vector<1x128xi32> to vector<1x128xf32>
    %9 = arith.mulf %8, %0 : vector<1x128xf32>
    %10 = arith.addf %9, %6 : vector<1x128xf32>
    %c0_2 = arith.constant 0 : index
    %c0_3 = arith.constant 0 : index
    %11 = vector.load %arg2[%c0_2, %c0_3] : memref<1x128xf32, #tpu.memory_space<vmem>>, vector<1x128xf32>
    tpu.vector_store %arg2[%c0_2, %c0_3], %10 {strides = array<i32>} : memref<1x128xf32, #tpu.memory_space<vmem>>, vector<1x128xf32>,
    return
  }
  func.func @transform_0(%arg0: i32) -> (i32, i32) {
    %c0_i32 = arith.constant 0 : i32
    %c0_i32_0 = arith.constant 0 : i32
    %c0_i32_1 = arith.constant 0 : i32
    return %c0_i32, %c0_i32_0 : i32, i32
  }
  func.func @transform_1(%arg0: i32) -> (i32, i32) {
    %c0_i32 = arith.constant 0 : i32
    %c0_i32_0 = arith.constant 0 : i32
    return %arg0, %c0_i32 : i32, i32
  }
}

</mosaic_0001>

<llo_original>
// kernel: tpu_custom_call.1
$region0: #{tpu_custom_call.1}
  #allocation0 [shape = 'u32[]', space=smem, size = 0x4, offset = 0x4, fixed_abs, tag = 'smem constant byte address 0x4 - core index']
  #allocation1 [shape = 'u32[72,128]{1,0:T(1,128)}', space=vmem, size = 0x9000, scoped, tag = 'internal scratch']
  %s0 = inlined_call_operand.hbm [shape: f32[2,128], index: 0, kind: input, shape index: {}]
  %s1 = inlined_call_operand.hbm [shape: f32[1,128], index: 1, kind: output, shape index: {}]
  %s2 = sld [smem:[#allocation0]]
  $region18: #{tpu_custom_call.1} parent=0
    _
  %s4 = ssub.s32 1, %s2
  %s5 = scalar_select 0, %s4, %s2
  $region1: #{tpu_custom_call.1} parent=0
    #allocation2 [shape = 'u8[1024]{0}', space=vmem, size = 0x400, scoped, tag = 'input window, operand 0, single buffered']
    #allocation3 [shape = 's32[1]{0}', space=sflag, size = 0x4, scoped, tag = 'scoped memory for tpu_custom_call.1']
    #allocation4 [shape = 's32[1]{0}', space=sflag, size = 0x4, scoped, tag = 'scoped memory for tpu_custom_call.1']
    #allocation5 [shape = 'u8[512]{0}', space=vmem, size = 0x400, scoped, tag = 'output window, operand 0, single buffered']
    %6 = vsyncpa [#allocation3], 0
    %7 = vsyncpa [#allocation4], 0
    // Predicated region
    $region2: #{tpu_custom_call.1} parent=1 // pred_check
      _
    $region3: #{tpu_custom_call.1} parent=1 // pred_check_branch
      %9 = sbr.rel (0) target = $region5
    $region4: #{tpu_custom_call.1} parent=1 // pred_region
      %11 = vsyncadd [#allocation3], 0
      %s13 = sshll.u32 %s0, 4
      %s14 = int_to_ptr.hbm [resolvable:$true] %s13
      %s15 = sshll.u32 [#allocation2], 4
      %s16 = int_to_ptr.vmem [resolvable:$true] %s15
      %18 = dma.hbm_to_vmem [thread:$0]  %s14, 32, %s16, [#allocation3]
    $region5: #{tpu_custom_call.1} parent=1 // pred_fallthru
      _
    // Predicated region
    $region6: #{tpu_custom_call.1} parent=1 // pred_check
      _
    $region7: #{tpu_custom_call.1} parent=1 // pred_check_branch
      %20 = sbr.rel (0) target = $region9
    $region8: #{tpu_custom_call.1} parent=1 // pred_region
      %22 = dma.done [#allocation3], 32
    $region9: #{tpu_custom_call.1} parent=1 // pred_fallthru
      _
    %v23 = vld [vmem:[#allocation2] sm:$0x1]
    %v24 = vld [vmem:[#allocation2 + $0x1] sm:$0x1]
    %s25 = scvt.s32.f32 0
    %v26 = vstv %s25
    %v27 = vmul.f32 %v26, %v23
    %v28 = vadd.f32 %v27, %v24
    %v29 = vlaneseq
    %v30 = vshrl.u32 %v29, 7
    %v31 = vcvt.s32.f32 %v30
    %v32 = vmul.f32 %v31, %v23
    %v33 = vadd.f32 %v32, %v28
    %34 = vst [vmem:[#allocation5] sm:$0x1] %v33
    // Predicated region
    $region10: #{tpu_custom_call.1} parent=1 // pred_check
      _
    $region11: #{tpu_custom_call.1} parent=1 // pred_check_branch
      %36 = sbr.rel (0) target = $region13
    $region12: #{tpu_custom_call.1} parent=1 // pred_region
      %38 = vsyncadd [#allocation4], 0
      %s40 = sshll.u32 [#allocation5], 4
      %s41 = int_to_ptr.vmem [resolvable:$true] %s40
      %s42 = sshll.u32 %s1, 4
      %s43 = int_to_ptr.hbm [resolvable:$true] %s42
      %45 = dma.vmem_to_hbm [thread:$0]  %s41, 16, %s43, [#allocation4]
    $region13: #{tpu_custom_call.1} parent=1 // pred_fallthru
      _
    // Predicated region
    $region14: #{tpu_custom_call.1} parent=1 // pred_check
      _
    $region15: #{tpu_custom_call.1} parent=1 // pred_check_branch
      %47 = sbr.rel (0) target = $region17
    $region16: #{tpu_custom_call.1} parent=1 // pred_region
      %49 = dma.done [#allocation4], 16
    $region17: #{tpu_custom_call.1} parent=1 // pred_fallthru
      _
    %50 = vsyncpa [#allocation3], 1
    %51 = vsyncpa [#allocation4], 1

</llo_original>
